<compile_context>
chip_gen: v7x
topology: tpu7x:2x2x1
jax: 0.10.0
libtpu: 0.0.40
codegen_flags: <defaults>
</compile_context>

<pallas_src>
from math import sqrt

import jax
import jax.numpy as jnp
from jax.experimental import pallas as pl
from jax.experimental.pallas import tpu as pltpu


def _rank1_factor_kernel(x_ref, w_ref, v_ref, o_ref):
    """o[r, 0] = sum_h tanh((x @ W)[r, h]) * v[h, 0]   (v already carries 1/scale)."""
    t = jnp.tanh(jnp.dot(x_ref[...], w_ref[...],
                         preferred_element_type=jnp.float32))                 # (R, H)
    o_ref[...] = jnp.dot(t, v_ref[...], preferred_element_type=jnp.float32)   # (R, 1)


def _rank1_factor(x2d, W, v_col, *, max_row_tile=1024):
    """Prologue: per-row rank-1 factor of the separable concat score.

    x2d is the batch-flattened operand ((B*T, M) or (B*S, N)), so one grid step
    processes many batch elements at once (fills MXU sublanes, amortizes the
    ~0.35 us per-step overhead).
    """
    rows, K = x2d.shape
    H = W.shape[1]
    # Full-dim block when small (always legal); otherwise a multiple-of-8 row tile
    # with Pallas-masked tail handling.
    r_tile = rows if rows <= max_row_tile else max_row_tile
    return pl.pallas_call(
        _rank1_factor_kernel,
        out_shape=jax.ShapeDtypeStruct((rows, 1), jnp.float32),
        grid=(pl.cdiv(rows, r_tile),),
        in_specs=[
            pl.BlockSpec((r_tile, K), lambda r: (r, 0)),
            pl.BlockSpec((K, H), lambda r: (0, 0)),   # grid-invariant: VMEM-resident
            pl.BlockSpec((H, 1), lambda r: (0, 0)),
        ],
        out_specs=pl.BlockSpec((r_tile, 1), lambda r: (r, 0)),
        compiler_params=pltpu.CompilerParams(
            dimension_semantics=("parallel",),
            vmem_limit_bytes=32 * 1024 * 1024),
    )(x2d, W, v_col)


def _bcast_add_kernel(a_ref, c_ref, o_ref):
    # a_ref: (B_blk, T_tile, 1), c_ref: (B_blk, 1, S_tile) -> o_ref: (B_blk, T_tile, S_tile)
    # Pure broadcast-add epilogue: the only per-output-vreg work is one add + store.
    o_ref[...] = a_ref[...] + c_ref[...]


def operation_scorer(query, keys, W1, W2, v, scaled=True):
    """Pallas implementation of OperationScorer.forward (op='concat', Tanh)."""
    B, T, M = query.shape
    B2, S, N = keys.shape
    assert B == B2
    N_w, H = W1.shape
    M_w, H2 = W2.shape
    assert N_w == N and M_w == M and H == H2 and v.shape == (2 * H,)

    # scale = sqrt(max(*W1.shape, *W2.shape)) if scaled else 1
    scale = sqrt(max(N, H, M, H)) if scaled else 1.0
    inv_scale = jnp.float32(1.0 / scale)

    # Fold 1/scale into the split-v vectors (H elements each; negligible wrapper cost).
    v1s = (v[:H] * inv_scale).astype(jnp.float32).reshape(H, 1)
    v2s = (v[H:] * inv_scale).astype(jnp.float32).reshape(H, 1)

    # Batch-flatten operands. These reshapes are free row-major bitcasts — no HBM pass,
    # and crucially no keys transpose.
    q2 = query.astype(jnp.float32).reshape(B * T, M)
    k2 = keys.astype(jnp.float32).reshape(B * S, N)

    # Prologue: compute the two rank-1 factors once (not per output tile).
    a_flat = _rank1_factor(q2, W2.astype(jnp.float32), v1s)   # (B*T, 1)
    c_flat = _rank1_factor(k2, W1.astype(jnp.float32), v2s)   # (B*S, 1)

    # Free reshapes (identical row-major linearization): no transpose, no copy.
    a = a_flat.reshape(B, T, 1)
    c = c_flat.reshape(B, 1, S)

    # --- tile selection for the (B, T, S) output write (the dominant HBM traffic) ---
    # Full-dim blocks when small (always legal even if not 8/128-aligned); otherwise
    # aligned tiles with masked tails. Keep output tiles around <=2 MiB so the
    # double-buffered block fits comfortably in v7x's 64 MiB VMEM.
    t_tile = T if T <= 256 else 256            # multiple of 8 when tiled
    s_tile = S if S <= 1024 else 1024          # multiple of 128 when tiled
    tile_bytes = t_tile * s_tile * 4
    b_blk = int(max(1, min(B, (2 * 1024 * 1024) // max(tile_bytes, 1))))

    grid = (pl.cdiv(B, b_blk), pl.cdiv(T, t_tile), pl.cdiv(S, s_tile))

    # Output shape is exactly (B, T, S): no padding, no post-slice second HBM pass.
    return pl.pallas_call(
        _bcast_add_kernel,
        out_shape=jax.ShapeDtypeStruct((B, T, S), jnp.float32),
        grid=grid,
        in_specs=[
            pl.BlockSpec((b_blk, t_tile, 1), lambda b, i, j: (b, i, 0)),
            pl.BlockSpec((b_blk, 1, s_tile), lambda b, i, j: (b, 0, j)),
        ],
        out_specs=pl.BlockSpec((b_blk, t_tile, s_tile), lambda b, i, j: (b, i, j)),
        compiler_params=pltpu.CompilerParams(
            # All axes write distinct output blocks -> all parallel; on v7x both
            # TensorCores get work even when B == 1 (split over T/S tiles too).
            dimension_semantics=("parallel", "parallel", "parallel"),
            vmem_limit_bytes=32 * 1024 * 1024),
    )(a, c)


def operation_scorer_ref(query, keys, W1, W2, v, scaled=True):
    """Pure-JAX reference mirroring the PyTorch forward exactly."""
    N, H = W1.shape
    M = W2.shape[0]
    scale = sqrt(max(N, H, M, H)) if scaled else 1.0
    x1 = jnp.einsum('btm,mh->bth', query, W2)
    x2 = jnp.einsum('bsn,nh->bsh', keys, W1)
    B, T = x1.shape[0], x1.shape[1]
    S = x2.shape[1]
    x1b = jnp.broadcast_to(x1[:, :, None, :], (B, T, S, H))
    x2b = jnp.broadcast_to(x2[:, None, :, :], (B, T, S, H))
    f = jnp.tanh(jnp.concatenate([x1b, x2b], axis=-1))
    score = jnp.einsum('btsh,h->bts', f, v)
    return score / scale


if __name__ == "__main__":
    # Small shapes consistent with the module:
    B, T, S = 2, 8, 8          # batch, target_len, source_len
    query_size, key_size, attn_hidden = 16, 16, 32

    key = jax.random.PRNGKey(0)
    k_q, k_k, k_w1, k_w2, k_v = jax.random.split(key, 5)

    query = jax.random.normal(k_q, (B, T, query_size), dtype=jnp.float32)
    keys = jax.random.normal(k_k, (B, S, key_size), dtype=jnp.float32)

    # Deterministic parameter init (mirrors torch.randn shapes in __init__).
    W1 = jax.random.normal(k_w1, (key_size, attn_hidden), dtype=jnp.float32)
    W2 = jax.random.normal(k_w2, (query_size, attn_hidden), dtype=jnp.float32)
    v = jax.random.normal(k_v, (2 * attn_hidden,), dtype=jnp.float32)  # op='concat'

    out = operation_scorer(query, keys, W1, W2, v, scaled=True)
    out = jax.block_until_ready(out)

    ref = operation_scorer_ref(query, keys, W1, W2, v, scaled=True)
    assert out.shape == (B, T, S)
    assert jnp.allclose(out, ref, atol=1e-4, rtol=1e-4), "mismatch vs reference"

    print("KERNEL_OK")
</pallas_src>

<mosaic_0001>
module attributes {stable_mosaic.version = 11 : i64} {
  func.func @_rank1_factor_kernel(%arg0: i32, %arg1: memref<16x16xf32, #tpu.memory_space<vmem>>, %arg2: memref<16x32xf32, #tpu.memory_space<vmem>>, %arg3: memref<32x1xf32, #tpu.memory_space<vmem>>, %arg4: memref<16x1xf32, #tpu.memory_space<vmem>>) attributes {dimension_semantics = [#tpu.dimension_semantics<parallel>], iteration_bounds = array<i64: 1>, scalar_prefetch = 0 : i64, scratch_operands = 0 : i64, tpu.core_type = #tpu.core_type<tc>, window_params = [{transform_indices = @transform_0, window_bounds = array<i64: 16, 16>}, {pipeline_mode = #tpu.pipeline_mode<synchronous>, transform_indices = @transform_1, window_bounds = array<i64: 16, 32>}, {pipeline_mode = #tpu.pipeline_mode<synchronous>, transform_indices = @transform_2, window_bounds = array<i64: 32, 1>}, {transform_indices = @transform_3, window_bounds = array<i64: 16, 1>}]} {
    %c0 = arith.constant 0 : index
    %c0_0 = arith.constant 0 : index
    %0 = vector.load %arg1[%c0, %c0_0] : memref<16x16xf32, #tpu.memory_space<vmem>>, vector<16x16xf32>
    %c0_1 = arith.constant 0 : index
    %c0_2 = arith.constant 0 : index
    %1 = vector.load %arg2[%c0_1, %c0_2] : memref<16x32xf32, #tpu.memory_space<vmem>>, vector<16x32xf32>
    %cst = arith.constant dense<0.000000e+00> : vector<16x32xf32>
    %2 = tpu.matmul %0, %1, %cst {dimension_numbers = #tpu.dot_dimension_numbers<[1], [0], [0], [1], [0, 0, 1, 1], [], []>} : vector<16x16xf32>, vector<16x32xf32>, vector<16x32xf32> -> vector<16x32xf32>
    %3 = math.tanh %2 : vector<16x32xf32>
    %c0_3 = arith.constant 0 : index
    %c0_4 = arith.constant 0 : index
    %4 = vector.load %arg3[%c0_3, %c0_4] : memref<32x1xf32, #tpu.memory_space<vmem>>, vector<32x1xf32>
    %cst_5 = arith.constant dense<0.000000e+00> : vector<16x1xf32>
    %5 = tpu.matmul %3, %4, %cst_5 {dimension_numbers = #tpu.dot_dimension_numbers<[1], [0], [0], [1], [0, 0, 1, 1], [], []>} : vector<16x32xf32>, vector<32x1xf32>, vector<16x1xf32> -> vector<16x1xf32>
    %c0_6 = arith.constant 0 : index
    %c0_7 = arith.constant 0 : index
    %6 = vector.load %arg4[%c0_6, %c0_7] : memref<16x1xf32, #tpu.memory_space<vmem>>, vector<16x1xf32>
    tpu.vector_store %arg4[%c0_6, %c0_7], %5 {strides = array<i32>} : memref<16x1xf32, #tpu.memory_space<vmem>>, vector<16x1xf32>,
    return
  }
  func.func @transform_0(%arg0: i32) -> (i32, i32) {
    %c0_i32 = arith.constant 0 : i32
    %c0_i32_0 = arith.constant 0 : i32
    return %arg0, %c0_i32 : i32, i32
  }
  func.func @transform_1(%arg0: i32) -> (i32, i32) {
    %c0_i32 = arith.constant 0 : i32
    %c0_i32_0 = arith.constant 0 : i32
    %c0_i32_1 = arith.constant 0 : i32
    return %c0_i32, %c0_i32_0 : i32, i32
  }
  func.func @transform_2(%arg0: i32) -> (i32, i32) {
    %c0_i32 = arith.constant 0 : i32
    %c0_i32_0 = arith.constant 0 : i32
    %c0_i32_1 = arith.constant 0 : i32
    return %c0_i32, %c0_i32_0 : i32, i32
  }
  func.func @transform_3(%arg0: i32) -> (i32, i32) {
    %c0_i32 = arith.constant 0 : i32
    %c0_i32_0 = arith.constant 0 : i32
    return %arg0, %c0_i32 : i32, i32
  }
}

</mosaic_0001>

<llo_original>
// kernel: tpu_custom_call.1
$region0: #{tpu_custom_call.1}
  #allocation0 [shape = 'u32[]', space=smem, size = 0x4, offset = 0x4, fixed_abs, tag = 'smem constant byte address 0x4 - core index']
  #allocation1 [shape = 'u32[144,128]{1,0:T(1,128)}', space=vmem, size = 0x12000, scoped, tag = 'internal scratch']
  %s0 = inlined_call_operand.vmem [shape: f32[16,16], index: 0, kind: input, shape index: {}]
  %s1 = inlined_call_operand.vmem [shape: f32[16,32], index: 1, kind: input, shape index: {}]
  %s2 = inlined_call_operand.vmem [shape: f32[32,1], index: 2, kind: input, shape index: {}]
  %s3 = inlined_call_operand.vmem [shape: f32[16,1], index: 3, kind: output, shape index: {}]
  %s4 = sld [smem:[#allocation0]]
  $region22: #{tpu_custom_call.1} parent=0
    _
  %s6 = ssub.s32 1, %s4
  %s7 = scalar_select 0, %s6, %s4
  // Predicated region
  $region2: #{tpu_custom_call.1} parent=0 // pred_check
    _
  $region3: #{tpu_custom_call.1} parent=0 // pred_check_branch
    %9 = sbr.rel (0) target = $region5
  $region4: #{tpu_custom_call.1} parent=0 // pred_region
    _
  $region5: #{tpu_custom_call.1} parent=0 // pred_fallthru
    _
  // Predicated region
  $region6: #{tpu_custom_call.1} parent=0 // pred_check
    _
  $region7: #{tpu_custom_call.1} parent=0 // pred_check_branch
    %11 = sbr.rel (0) target = $region9
  $region8: #{tpu_custom_call.1} parent=0 // pred_region
    _
  $region9: #{tpu_custom_call.1} parent=0 // pred_fallthru
    _
  // Predicated region
  $region10: #{tpu_custom_call.1} parent=0 // pred_check
    _
  $region11: #{tpu_custom_call.1} parent=0 // pred_check_branch
    %13 = sbr.rel (0) target = $region13
  $region12: #{tpu_custom_call.1} parent=0 // pred_region
    _
  $region13: #{tpu_custom_call.1} parent=0 // pred_fallthru
    _
  %v14 = vld [vmem:[%s0] sm:$0xff]
  %v15 = vld [vmem:[%s0 + $0x8] sm:$0xff]
  %v16 = vld [vmem:[%s1] sm:$0xff]
  %v17 = vld [vmem:[%s1 + $0x8] sm:$0xff]
  %vm18 = vcmask 130048
  %v20 = vsel %vm18, %v14, 0
  %v23 = vsel %vm18, %v15, 0
  %25 = vmatprep.subr.mxu0 0.0
  %26 = vmatpush1.msra.mxu0 %v16
  %27 = vmatprep.subr.mxu0 0.0
  %28 = vmatpush1.msra.mxu0 %v17
  %29 = vmatprep.subr.mxu0 0.0
  %30 = vmatpush1.msra.mxu0 0.0
  %31 = vmatprep.subr.mxu0 0.0
  %32 = vmatpush1.msra.mxu0 0.0
  %33 = vmatprep.subr.mxu0 0.0
  %34 = vmatpush1.msra.mxu0 0.0
  %35 = vmatprep.subr.mxu0 0.0
  %36 = vmatpush1.msra.mxu0 0.0
  %37 = vmatprep.subr.mxu0 0.0
  %38 = vmatpush1.msra.mxu0 0.0
  %39 = vmatprep.subr.mxu0 0.0
  %40 = vmatpush1.msra.mxu0 0.0
  %41 = vmatprep.subr.mxu0 0.0
  %42 = vmatpush1.msra.mxu0 0.0
  %43 = vmatprep.subr.mxu0 0.0
  %44 = vmatpush1.msra.mxu0 0.0
  %45 = vmatprep.subr.mxu0 0.0
  %46 = vmatpush1.msra.mxu0 0.0
  %47 = vmatprep.subr.mxu0 0.0
  %48 = vmatpush1.msra.mxu0 0.0
  %49 = vmatprep.subr.mxu0 0.0
  %50 = vmatpush1.msra.mxu0 0.0
  %51 = vmatprep.subr.mxu0 0.0
  %52 = vmatpush1.msra.mxu0 0.0
  %53 = vmatprep.subr.mxu0 0.0
  %54 = vmatpush1.msra.mxu0 0.0
  %55 = vmatprep.subr.mxu0 0.0
  %56 = vmatpush1.msra.mxu0 0.0
  %57 = vmatprep.subr.mxu0 0.0
  %58 = vmatpush1.msra.mxu0 0.0
  %59 = vmatprep.subr.mxu0 0.0
  %60 = vmatpush1.msra.mxu0 0.0
  %61 = vmatprep.subr.mxu0 0.0
  %62 = vmatpush1.msra.mxu0 0.0
  %63 = vmatprep.subr.mxu0 0.0
  %64 = vmatpush1.msra.mxu0 0.0
  %65 = vmatprep.subr.mxu0 0.0
  %66 = vmatpush1.msra.mxu0 0.0
  %67 = vmatprep.subr.mxu0 0.0
  %68 = vmatpush1.msra.mxu0 0.0
  %69 = vmatprep.subr.mxu0 0.0
  %70 = vmatpush1.msra.mxu0 0.0
  %71 = vmatprep.subr.mxu0 0.0
  %72 = vmatpush1.msra.mxu0 0.0
  %73 = vmatprep.subr.mxu0 0.0
  %74 = vmatpush1.msra.mxu0 0.0
  %75 = vmatprep.subr.mxu0 0.0
  %76 = vmatpush1.msra.mxu0 0.0
  %77 = vmatprep.subr.mxu0 0.0
  %78 = vmatpush1.msra.mxu0 0.0
  %79 = vmatprep.subr.mxu0 0.0
  %80 = vmatpush1.msra.mxu0 0.0
  %81 = vmatprep.subr.mxu0 0.0
  %82 = vmatpush1.msra.mxu0 0.0
  %83 = vmatprep.subr.mxu0 0.0
  %84 = vmatpush1.msra.mxu0 0.0
  %85 = vmatprep.subr.mxu0 0.0
  %86 = vmatpush1.msra.mxu0 0.0
  %87 = vmatprep.subr.mxu0 0.0
  %88 = vmatpush1.msra.mxu0 0.0
  %89 = vmatprep.mubr.f32.mxu0 0.0
  %90 = vmatmul.mubr.f32.gmra.mrb[0].mxu0 %v20
  %v91 = vpop.f32.mrb[0].mxu0
  %v92 = vadd.f32 0.0, %v91
  %v93 = vpop.f32.mrb[0].mxu0
  %94 = vmatprep.mubr.f32.mxu0 0.0
  %95 = vmatmul.mubr.f32.gmra.mrb[0].mxu0 %v23
  %v96 = vpop.f32.mrb[0].mxu0
  %v97 = vadd.f32 0.0, %v96
  %v98 = vpop.f32.mrb[0].mxu0
  %99 = vdwg.mxu0
  %v100 = vtanh.pop %v92
  %v101 = vtanh.pop %v97
  %v102 = vld [vmem:[%s2] sm:$0xff]
  %v103 = vld [vmem:[%s2 + $0x8] sm:$0xff]
  %v104 = vld [vmem:[%s2 + $0x10] sm:$0xff]
  %v105 = vld [vmem:[%s2 + $0x18] sm:$0xff]
  %vm106 = vcmask 261120
  %v108 = vsel %vm106, %v100, 0
  %v111 = vsel %vm106, %v101, 0
  %113 = vmatprep.subr.mxu0 0.0
  %114 = vmatpush1.msra.mxu0 %v102
  %115 = vmatprep.subr.mxu0 0.0
  %116 = vmatpush1.msra.mxu0 %v103
  %117 = vmatprep.subr.mxu0 0.0
  %118 = vmatpush1.msra.mxu0 %v104
  %119 = vmatprep.subr.mxu0 0.0
  %120 = vmatpush1.msra.mxu0 %v105
  %121 = vmatprep.subr.mxu0 0.0
  %122 = vmatpush1.msra.mxu0 0.0
  %123 = vmatprep.subr.mxu0 0.0
  %124 = vmatpush1.msra.mxu0 0.0
  %125 = vmatprep.subr.mxu0 0.0
  %126 = vmatpush1.msra.mxu0 0.0
  %127 = vmatprep.subr.mxu0 0.0
  %128 = vmatpush1.msra.mxu0 0.0
  %129 = vmatprep.subr.mxu0 0.0
  %130 = vmatpush1.msra.mxu0 0.0
  %131 = vmatprep.subr.mxu0 0.0
  %132 = vmatpush1.msra.mxu0 0.0
  %133 = vmatprep.subr.mxu0 0.0
  %134 = vmatpush1.msra.mxu0 0.0
  %135 = vmatprep.subr.mxu0 0.0
  %136 = vmatpush1.msra.mxu0 0.0
  %137 = vmatprep.subr.mxu0 0.0
  %138 = vmatpush1.msra.mxu0 0.0
  %139 = vmatprep.subr.mxu0 0.0
  %140 = vmatpush1.msra.mxu0 0.0
  %141 = vmatprep.subr.mxu0 0.0
  %142 = vmatpush1.msra.mxu0 0.0
  %143 = vmatprep.subr.mxu0 0.0
  %144 = vmatpush1.msra.mxu0 0.0
  %145 = vmatprep.subr.mxu0 0.0
  %146 = vmatpush1.msra.mxu0 0.0
  %147 = vmatprep.subr.mxu0 0.0
  %148 = vmatpush1.msra.mxu0 0.0
  %149 = vmatprep.subr.mxu0 0.0
  %150 = vmatpush1.msra.mxu0 0.0
  %151 = vmatprep.subr.mxu0 0.0
  %152 = vmatpush1.msra.mxu0 0.0
  %153 = vmatprep.subr.mxu0 0.0
  %154 = vmatpush1.msra.mxu0 0.0
  %155 = vmatprep.subr.mxu0 0.0
  %156 = vmatpush1.msra.mxu0 0.0
  %157 = vmatprep.subr.mxu0 0.0
  %158 = vmatpush1.msra.mxu0 0.0
  %159 = vmatprep.subr.mxu0 0.0
  %160 = vmatpush1.msra.mxu0 0.0
  %161 = vmatprep.subr.mxu0 0.0
  %162 = vmatpush1.msra.mxu0 0.0
  %163 = vmatprep.subr.mxu0 0.0
  %164 = vmatpush1.msra.mxu0 0.0
  %165 = vmatprep.subr.mxu0 0.0
  %166 = vmatpush1.msra.mxu0 0.0
  %167 = vmatprep.subr.mxu0 0.0
  %168 = vmatpush1.msra.mxu0 0.0
  %169 = vmatprep.subr.mxu0 0.0
  %170 = vmatpush1.msra.mxu0 0.0
  %171 = vmatprep.subr.mxu0 0.0
  %172 = vmatpush1.msra.mxu0 0.0
  %173 = vmatprep.subr.mxu0 0.0
  %174 = vmatpush1.msra.mxu0 0.0
  %175 = vmatprep.subr.mxu0 0.0
  %176 = vmatpush1.msra.mxu0 0.0
  %177 = vmatprep.mubr.f32.mxu0 0.0
  %178 = vmatmul.mubr.f32.gmra.mrb[0].mxu0 %v108
  %v179 = vpop.f32.mrb[0].mxu0
  %v180 = vadd.f32 0.0, %v179
  %v181 = vpop.f32.mrb[0].mxu0
  %182 = vmatprep.mubr.f32.mxu0 0.0
  %183 = vmatmul.mubr.f32.gmra.mrb[0].mxu0 %v111
  %v184 = vpop.f32.mrb[0].mxu0
  %v185 = vadd.f32 0.0, %v184
  %v186 = vpop.f32.mrb[0].mxu0
  %187 = vdwg.mxu0
  %vm188 = vcmask 7168
  %189 = vst.msk [vmem:[%s3] sm:$0xff] %vm188, %v180
  %190 = vst.msk [vmem:[%s3 + $0x8] sm:$0xff] %vm188, %v185
  // Predicated region
  $region14: #{tpu_custom_call.1} parent=0 // pred_check
    _
  $region15: #{tpu_custom_call.1} parent=0 // pred_check_branch
    %192 = sbr.rel (0) target = $region17
  $region16: #{tpu_custom_call.1} parent=0 // pred_region
    _
  $region17: #{tpu_custom_call.1} parent=0 // pred_fallthru
    _
  // Predicated region
  $region18: #{tpu_custom_call.1} parent=0 // pred_check
    _
  $region19: #{tpu_custom_call.1} parent=0 // pred_check_branch
    %194 = sbr.rel (0) target = $region21
  $region20: #{tpu_custom_call.1} parent=0 // pred_region
    _
  $region21: #{tpu_custom_call.1} parent=0 // pred_fallthru
    _

</llo_original>
